<compile_context>
chip_gen: v5e
topology: v5e:2x2
jax: 0.10.0
libtpu: 0.0.40
codegen_flags: <defaults>
</compile_context>

<pallas_src>
import math
import functools

import jax
import jax.numpy as jnp
from jax.experimental import pallas as pl
from jax.experimental.pallas import tpu as pltpu


def _round_up(x, m):
    return (x + m - 1) // m * m


# ----------------------------------------------------------------------------------
# Kernel: scaled one-hot embedding lookup for one block of token ids
# ----------------------------------------------------------------------------------
def input_embedder_kernel(ids_ref, table_ref, out_ref, *, scale):
    ids = ids_ref[...]                                   # (TS, 1) int32
    ts = ids.shape[0]
    vocab = table_ref.shape[0]
    table = table_ref[...]                               # (L, D), full table resident

    # Scaled one-hot in the table's dtype: sqrt(d_model) rides the MXU for free.
    match = jax.lax.broadcasted_iota(jnp.int32, (ts, vocab), 1) == ids
    onehot = jnp.where(match,
                       jnp.asarray(scale, table.dtype),
                       jnp.asarray(0, table.dtype))      # (TS, L)

    out_ref[...] = jnp.dot(
        onehot, table,
        preferred_element_type=jnp.float32,
        precision=jax.lax.Precision.HIGHEST,
    ).astype(out_ref.dtype)                              # (TS, D)


# ----------------------------------------------------------------------------------
# Wrapper: no padding, no post-call slice; ragged final block handled by Pallas
# ----------------------------------------------------------------------------------
@functools.partial(jax.jit, static_argnames=("d_model", "block_s"))
def input_embedder(ids, table, d_model, block_s=1024):
    L, D = table.shape
    if D != d_model:
        raise ValueError(f"table.shape[1]={D} does not match d_model={d_model}")

    orig_shape = ids.shape
    flat = ids.reshape(-1, 1).astype(jnp.int32)          # (S, 1)
    S = flat.shape[0]

    # Sequence tile: sublane-aligned (x8), clamped to the input size.  For large S,
    # grid >= 2 so the "parallel" axis splits across both v7x TensorCores.
    bs = min(block_s, _round_up(S, 8))
    grid = pl.cdiv(S, bs)

    scale = math.sqrt(d_model)
    itemsize = jnp.dtype(table.dtype).itemsize
    cost = pl.CostEstimate(
        flops=2 * S * L * D,
        transcendentals=0,
        bytes_accessed=S * 4 + L * D * itemsize + S * D * itemsize,
    )

    out = pl.pallas_call(
        functools.partial(input_embedder_kernel, scale=scale),
        out_shape=jax.ShapeDtypeStruct((S, D), table.dtype),
        grid=(grid,),
        in_specs=[
            # ids: (bs, 1) — last dim equals the full array dim, bs is x8-aligned.
            pl.BlockSpec((bs, 1), lambda i: (i, 0)),
            # table: full-dim block, grid-invariant (never re-fetched after step 0).
            pl.BlockSpec((L, D), lambda i: (0, 0)),
        ],
        # output: full d_model as the lane dim — no zero-padded garbage lanes,
        # no post-call slice.
        out_specs=pl.BlockSpec((bs, D), lambda i: (i, 0)),
        compiler_params=pltpu.CompilerParams(
            dimension_semantics=("parallel",),
            vmem_limit_bytes=32 * 1024 * 1024,
        ),
        cost_estimate=cost,
    )(flat, table)

    return out.reshape(*orig_shape, D)


# ----------------------------------------------------------------------------------
if __name__ == "__main__":
    d_model = 32
    max_path_len = 16

    key = jax.random.PRNGKey(0)
    k_tab, k_ids, k_ids2 = jax.random.split(key, 3)

    # nn.Embedding weight init ~ N(0, 1)
    table = jax.random.normal(k_tab, (max_path_len, d_model), jnp.float32)

    # --- test 1: small, exact-fit shapes (batch=2, seq=8) ---
    ids = jax.random.randint(k_ids, (2, 8), 0, max_path_len, jnp.int32)
    out = jax.block_until_ready(input_embedder(ids, table, d_model))
    ref = table[ids] * math.sqrt(d_model)
    assert out.shape == (2, 8, d_model)
    assert jnp.allclose(out, ref, atol=1e-5, rtol=1e-5)

    # --- test 2: ragged final block + multi-step parallel grid (batch=3, seq=50) ---
    ids2 = jax.random.randint(k_ids2, (3, 50), 0, max_path_len, jnp.int32)
    out2 = jax.block_until_ready(input_embedder(ids2, table, d_model, block_s=64))
    ref2 = table[ids2] * math.sqrt(d_model)
    assert out2.shape == (3, 50, d_model)
    assert jnp.allclose(out2, ref2, atol=1e-5, rtol=1e-5)

    print("KERNEL_OK")
</pallas_src>

<mosaic_0001>
module attributes {stable_mosaic.version = 11 : i64} {
  func.func @input_embedder_kernel(%arg0: i32, %arg1: memref<16x1xi32, #tpu.memory_space<vmem>>, %arg2: memref<16x32xf32, #tpu.memory_space<vmem>>, %arg3: memref<16x32xf32, #tpu.memory_space<vmem>>) attributes {dimension_semantics = [#tpu.dimension_semantics<parallel>], iteration_bounds = array<i64: 1>, scalar_prefetch = 0 : i64, scratch_operands = 0 : i64, tpu.core_type = #tpu.core_type<tc>, window_params = [{transform_indices = @transform_0, window_bounds = array<i64: 16, 1>}, {pipeline_mode = #tpu.pipeline_mode<synchronous>, transform_indices = @transform_1, window_bounds = array<i64: 16, 32>}, {transform_indices = @transform_2, window_bounds = array<i64: 16, 32>}]} {
    %c0 = arith.constant 0 : index
    %c0_0 = arith.constant 0 : index
    %0 = vector.load %arg1[%c0, %c0_0] : memref<16x1xi32, #tpu.memory_space<vmem>>, vector<16x1xi32>
    %c0_1 = arith.constant 0 : index
    %c0_2 = arith.constant 0 : index
    %1 = vector.load %arg2[%c0_1, %c0_2] : memref<16x32xf32, #tpu.memory_space<vmem>>, vector<16x32xf32>
    %2 = tpu.iota {dimensions = array<i32: 1>} : vector<16x16xi32>
    %3 = vector.broadcast %0 : vector<16x1xi32> to vector<16x16xi32>
    %4 = arith.cmpi eq, %2, %3 : vector<16x16xi32>
    %cst = arith.constant 5.65685415 : f32
    %cst_3 = arith.constant 0.000000e+00 : f32
    %5 = vector.broadcast %cst : f32 to vector<16x16xf32>
    %6 = vector.broadcast %cst_3 : f32 to vector<16x16xf32>
    %7 = arith.select %4, %5, %6 : vector<16x16xi1>, vector<16x16xf32>
    %cst_4 = arith.constant dense<0.000000e+00> : vector<16x32xf32>
    %8 = tpu.matmul %7, %1, %cst_4 {dimension_numbers = #tpu.dot_dimension_numbers<[1], [0], [0], [1], [0, 0, 1, 1], [], []>, precision = #tpu.contract_precision<fp32>} : vector<16x16xf32>, vector<16x32xf32>, vector<16x32xf32> -> vector<16x32xf32>
    %c0_5 = arith.constant 0 : index
    %c0_6 = arith.constant 0 : index
    %9 = vector.load %arg3[%c0_5, %c0_6] : memref<16x32xf32, #tpu.memory_space<vmem>>, vector<16x32xf32>
    tpu.vector_store %arg3[%c0_5, %c0_6], %8 {strides = array<i32>} : memref<16x32xf32, #tpu.memory_space<vmem>>, vector<16x32xf32>,
    return
  }
  func.func @transform_0(%arg0: i32) -> (i32, i32) {
    %c0_i32 = arith.constant 0 : i32
    %c0_i32_0 = arith.constant 0 : i32
    return %arg0, %c0_i32 : i32, i32
  }
  func.func @transform_1(%arg0: i32) -> (i32, i32) {
    %c0_i32 = arith.constant 0 : i32
    %c0_i32_0 = arith.constant 0 : i32
    %c0_i32_1 = arith.constant 0 : i32
    return %c0_i32, %c0_i32_0 : i32, i32
  }
  func.func @transform_2(%arg0: i32) -> (i32, i32) {
    %c0_i32 = arith.constant 0 : i32
    %c0_i32_0 = arith.constant 0 : i32
    return %arg0, %c0_i32 : i32, i32
  }
}

</mosaic_0001>

<llo_original>
// kernel: input_embedder.1
$region0: #{input_embedder.1}
  #allocation0 [shape = 'u32[]', space=smem, size = 0x4, offset = 0x4, fixed_abs, tag = 'smem constant byte address 0x4 - core index']
  #allocation1 [shape = 'u32[72,128]{1,0:T(1,128)}', space=vmem, size = 0x9000, scoped, tag = 'internal scratch']
  %s0 = inlined_call_operand.vmem [shape: s32[16,1], index: 0, kind: input, shape index: {}]
  %s1 = inlined_call_operand.vmem [shape: f32[16,32], index: 1, kind: input, shape index: {}]
  %s2 = inlined_call_operand.hbm [shape: f32[16,32], index: 2, kind: output, shape index: {}]
  %s3 = sld [smem:[#allocation0]]
  $region18: #{input_embedder.1} parent=0
    _
  %s5 = ssub.s32 1, %s3
  %s6 = scalar_select 0, %s5, %s3
  $region1: #{input_embedder.1} parent=0
    #allocation2 [shape = 'u8[8192]{0}', space=vmem, size = 0x2000, scoped, tag = 'output window, operand 0, single buffered']
    #allocation3 [shape = 's32[1]{0}', space=sflag, size = 0x4, scoped, tag = 'scoped memory for input_embedder.1']
    %7 = vsyncpa [#allocation3], 0
    // Predicated region
    $region2: #{input_embedder.1} parent=1 // pred_check
      _
    $region3: #{input_embedder.1} parent=1 // pred_check_branch
      %9 = sbr.rel (0) target = $region5
    $region4: #{input_embedder.1} parent=1 // pred_region
      _
    $region5: #{input_embedder.1} parent=1 // pred_fallthru
      _
    // Predicated region
    $region6: #{input_embedder.1} parent=1 // pred_check
      _
    $region7: #{input_embedder.1} parent=1 // pred_check_branch
      %11 = sbr.rel (0) target = $region9
    $region8: #{input_embedder.1} parent=1 // pred_region
      _
    $region9: #{input_embedder.1} parent=1 // pred_fallthru
      _
    %v12 = vld [vmem:[%s0] sm:$0xff]
    %v13 = vld [vmem:[%s0 + $0x8] sm:$0xff]
    %v14 = vld [vmem:[%s1] sm:$0xff]
    %v15 = vld [vmem:[%s1 + $0x8] sm:$0xff]
    %v16 = vlaneseq
    %v17 = vand.u32 %v16, 127
    %18 = vset.pattern.permute.xlu0 0
    %19 = vperm.xlu0 %18, %v12
    %v20 = vpop.permute.xlu0 %19
    %21 = vset.pattern.permute.xlu0 0
    %22 = vperm.xlu0 %21, %v13
    %v23 = vpop.permute.xlu0 %22
    %vm24 = vcmp.eq.s32.totalorder %v17, %v20
    %vm25 = vcmp.eq.s32.totalorder %v17, %v23
    %v26 = vsel %vm24, 5.656854, 0.0
    %v27 = vsel %vm25, 5.656854, 0.0
    %vm28 = vcmask 130048
    %v30 = vsel %vm28, %v26, 0
    %v33 = vsel %vm28, %v27, 0
    %35 = vmatpush.msra.mxu0 0.0
    %36 = vmatpush.msra.mxu0 0.0
    %37 = vmatpush.msra.mxu0 0.0
    %38 = vmatpush.msra.mxu0 0.0
    %39 = vmatpush.msra.mxu0 0.0
    %40 = vmatpush.msra.mxu0 0.0
    %41 = vmatpush.msra.mxu0 0.0
    %42 = vmatpush.msra.mxu0 0.0
    %43 = vmatpush.msra.mxu0 0.0
    %44 = vmatpush.msra.mxu0 0.0
    %45 = vmatpush.msra.mxu0 0.0
    %46 = vmatpush.msra.mxu0 0.0
    %47 = vmatpush.msra.mxu0 0.0
    %48 = vmatpush.msra.mxu0 0.0
    %v49 = vand.u32 %v15, 4294901760
    %50 = vmatpush.msra.mxu0 %v49
    %v51 = vand.u32 %v14, 4294901760
    %52 = vmatpush.msra.mxu0 %v51
    %v53 = vand.u32 %v30, 4294901760
    %v54 = vsub.f32 %v30, %v53
    %v55 = vand.u32 %v54, 4294901760
    %v56 = vsub.f32 %v54, %v55
    %v57 = vand.u32 %v56, 4294901760
    %58 = vmatmul.f32.gmra.mxu0 %v57
    %v59 = vpop.f32.mrf.mxu0
    %v60 = vadd.f32 0.0, %v59
    %v61 = vand.u32 %v33, 4294901760
    %v62 = vsub.f32 %v33, %v61
    %v63 = vand.u32 %v62, 4294901760
    %v64 = vsub.f32 %v62, %v63
    %v65 = vand.u32 %v64, 4294901760
    %66 = vmatmul.f32.gmra.mxu0 %v65
    %v67 = vpop.f32.mrf.mxu0
    %v68 = vadd.f32 0.0, %v67
    %69 = vdwg.mxu0
    %70 = vmatpush.msra.mxu0 0.0
    %71 = vmatpush.msra.mxu0 0.0
    %72 = vmatpush.msra.mxu0 0.0
    %73 = vmatpush.msra.mxu0 0.0
    %74 = vmatpush.msra.mxu0 0.0
    %75 = vmatpush.msra.mxu0 0.0
    %76 = vmatpush.msra.mxu0 0.0
    %77 = vmatpush.msra.mxu0 0.0
    %78 = vmatpush.msra.mxu0 0.0
    %79 = vmatpush.msra.mxu0 0.0
    %80 = vmatpush.msra.mxu0 0.0
    %81 = vmatpush.msra.mxu0 0.0
    %82 = vmatpush.msra.mxu0 0.0
    %83 = vmatpush.msra.mxu0 0.0
    %v84 = vand.u32 %v15, 4294901760
    %v85 = vsub.f32 %v15, %v84
    %v86 = vand.u32 %v85, 4294901760
    %v87 = vsub.f32 %v85, %v86
    %v88 = vand.u32 %v87, 4294901760
    %89 = vmatpush.msra.mxu0 %v88
    %v90 = vand.u32 %v14, 4294901760
    %v91 = vsub.f32 %v14, %v90
    %v92 = vand.u32 %v91, 4294901760
    %v93 = vsub.f32 %v91, %v92
    %v94 = vand.u32 %v93, 4294901760
    %95 = vmatpush.msra.mxu0 %v94
    %v96 = vand.u32 %v30, 4294901760
    %97 = vmatmul.f32.gmra.mxu0 %v96
    %v98 = vpop.f32.mrf.mxu0
    %v99 = vadd.f32 %v60, %v98
    %v100 = vand.u32 %v33, 4294901760
    %101 = vmatmul.f32.gmra.mxu0 %v100
    %v102 = vpop.f32.mrf.mxu0
    %v103 = vadd.f32 %v68, %v102
    %104 = vdwg.mxu0
    %105 = vmatpush.msra.mxu0 0.0
    %106 = vmatpush.msra.mxu0 0.0
    %107 = vmatpush.msra.mxu0 0.0
    %108 = vmatpush.msra.mxu0 0.0
    %109 = vmatpush.msra.mxu0 0.0
    %110 = vmatpush.msra.mxu0 0.0
    %111 = vmatpush.msra.mxu0 0.0
    %112 = vmatpush.msra.mxu0 0.0
    %113 = vmatpush.msra.mxu0 0.0
    %114 = vmatpush.msra.mxu0 0.0
    %115 = vmatpush.msra.mxu0 0.0
    %116 = vmatpush.msra.mxu0 0.0
    %117 = vmatpush.msra.mxu0 0.0
    %118 = vmatpush.msra.mxu0 0.0
    %v119 = vand.u32 %v15, 4294901760
    %v120 = vsub.f32 %v15, %v119
    %121 = vmatpush.msra.mxu0 %v120
    %v122 = vand.u32 %v14, 4294901760
    %v123 = vsub.f32 %v14, %v122
    %124 = vmatpush.msra.mxu0 %v123
    %v125 = vand.u32 %v30, 4294901760
    %v126 = vsub.f32 %v30, %v125
    %127 = vmatmul.f32.gmra.mxu0 %v126
    %v128 = vpop.f32.mrf.mxu0
    %v129 = vadd.f32 %v99, %v128
    %v130 = vand.u32 %v33, 4294901760
    %v131 = vsub.f32 %v33, %v130
    %132 = vmatmul.f32.gmra.mxu0 %v131
    %v133 = vpop.f32.mrf.mxu0
    %v134 = vadd.f32 %v103, %v133
    %135 = vdwg.mxu0
    %136 = vmatpush.msra.mxu0 0.0
    %137 = vmatpush.msra.mxu0 0.0
    %138 = vmatpush.msra.mxu0 0.0
    %139 = vmatpush.msra.mxu0 0.0
    %140 = vmatpush.msra.mxu0 0.0
    %141 = vmatpush.msra.mxu0 0.0
    %142 = vmatpush.msra.mxu0 0.0
    %143 = vmatpush.msra.mxu0 0.0
    %144 = vmatpush.msra.mxu0 0.0
    %145 = vmatpush.msra.mxu0 0.0
    %146 = vmatpush.msra.mxu0 0.0
    %147 = vmatpush.msra.mxu0 0.0
    %148 = vmatpush.msra.mxu0 0.0
    %149 = vmatpush.msra.mxu0 0.0
    %v150 = vand.u32 %v15, 4294901760
    %151 = vmatpush.msra.mxu0 %v150
    %v152 = vand.u32 %v14, 4294901760
    %153 = vmatpush.msra.mxu0 %v152
    %v154 = vand.u32 %v30, 4294901760
    %v155 = vsub.f32 %v30, %v154
    %v156 = vand.u32 %v155, 4294901760
    %157 = vmatmul.f32.gmra.mxu0 %v156
    %v158 = vpop.f32.mrf.mxu0
    %v159 = vadd.f32 %v129, %v158
    %v160 = vand.u32 %v33, 4294901760
    %v161 = vsub.f32 %v33, %v160
    %v162 = vand.u32 %v161, 4294901760
    %163 = vmatmul.f32.gmra.mxu0 %v162
    %v164 = vpop.f32.mrf.mxu0
    %v165 = vadd.f32 %v134, %v164
    %166 = vdwg.mxu0
    %167 = vmatpush.msra.mxu0 0.0
    %168 = vmatpush.msra.mxu0 0.0
    %169 = vmatpush.msra.mxu0 0.0
    %170 = vmatpush.msra.mxu0 0.0
    %171 = vmatpush.msra.mxu0 0.0
    %172 = vmatpush.msra.mxu0 0.0
    %173 = vmatpush.msra.mxu0 0.0
    %174 = vmatpush.msra.mxu0 0.0
    %175 = vmatpush.msra.mxu0 0.0
    %176 = vmatpush.msra.mxu0 0.0
    %177 = vmatpush.msra.mxu0 0.0
    %178 = vmatpush.msra.mxu0 0.0
    %179 = vmatpush.msra.mxu0 0.0
    %180 = vmatpush.msra.mxu0 0.0
    %v181 = vand.u32 %v15, 4294901760
    %v182 = vsub.f32 %v15, %v181
    %v183 = vand.u32 %v182, 4294901760
    %184 = vmatpush.msra.mxu0 %v183
    %v185 = vand.u32 %v14, 4294901760
    %v186 = vsub.f32 %v14, %v185
    %v187 = vand.u32 %v186, 4294901760
    %188 = vmatpush.msra.mxu0 %v187
    %v189 = vand.u32 %v30, 4294901760
    %190 = vmatmul.f32.gmra.mxu0 %v189
    %v191 = vpop.f32.mrf.mxu0
    %v192 = vadd.f32 %v159, %v191
    %v193 = vand.u32 %v33, 4294901760
    %194 = vmatmul.f32.gmra.mxu0 %v193
    %v195 = vpop.f32.mrf.mxu0
    %v196 = vadd.f32 %v165, %v195
    %197 = vdwg.mxu0
    %198 = vmatpush.msra.mxu0 0.0
    %199 = vmatpush.msra.mxu0 0.0
    %200 = vmatpush.msra.mxu0 0.0
    %201 = vmatpush.msra.mxu0 0.0
    %202 = vmatpush.msra.mxu0 0.0
    %203 = vmatpush.msra.mxu0 0.0
    %204 = vmatpush.msra.mxu0 0.0
    %205 = vmatpush.msra.mxu0 0.0
    %206 = vmatpush.msra.mxu0 0.0
    %207 = vmatpush.msra.mxu0 0.0
    %208 = vmatpush.msra.mxu0 0.0
    %209 = vmatpush.msra.mxu0 0.0
    %210 = vmatpush.msra.mxu0 0.0
    %211 = vmatpush.msra.mxu0 0.0
    %v212 = vand.u32 %v15, 4294901760
    %213 = vmatpush.msra.mxu0 %v212
    %v214 = vand.u32 %v14, 4294901760
    %215 = vmatpush.msra.mxu0 %v214
    %v216 = vand.u32 %v30, 4294901760
    %217 = vmatmul.f32.gmra.mxu0 %v216
    %v218 = vpop.f32.mrf.mxu0
    %v219 = vadd.f32 %v192, %v218
    %v220 = vand.u32 %v33, 4294901760
    %221 = vmatmul.f32.gmra.mxu0 %v220
    %v222 = vpop.f32.mrf.mxu0
    %v223 = vadd.f32 %v196, %v222
    %224 = vdwg.mxu0
    %vm225 = vcmask 261120
    %226 = vst.msk [vmem:[#allocation2] sm:$0xff] %vm225, %v219
    %227 = vst.msk [vmem:[#allocation2 + $0x8] sm:$0xff] %vm225, %v223
    // Predicated region
    $region10: #{input_embedder.1} parent=1 // pred_check
      _
    $region11: #{input_embedder.1} parent=1 // pred_check_branch
      %229 = sbr.rel (0) target = $region13
    $region12: #{input_embedder.1} parent=1 // pred_region
      %231 = vsyncadd [#allocation3], 0
      %s232 = sshll.u32 [#allocation2], 4
      %s233 = int_to_ptr.vmem [resolvable:$true] %s232
      %s234 = sshll.u32 %s2, 4
      %s235 = int_to_ptr.hbm [resolvable:$true] %s234
      %240 = dma.vmem_to_hbm [thread:$0]  %s233, 256, %s235, [#allocation3], 128, 128, 8
    $region13: #{input_embedder.1} parent=1 // pred_fallthru
      _
    // Predicated region
    $region14: #{input_embedder.1} parent=1 // pred_check
      _
    $region15: #{input_embedder.1} parent=1 // pred_check_branch
      %242 = sbr.rel (0) target = $region17
    $region16: #{input_embedder.1} parent=1 // pred_region
      %244 = dma.done [#allocation3], 256
    $region17: #{input_embedder.1} parent=1 // pred_fallthru
      _
    %245 = vsyncpa [#allocation3], 1

</llo_original>
